<compile_context>
chip_gen: v7x
topology: tpu7x:2x2x1
jax: 0.10.0
libtpu: 0.0.40
codegen_flags: <defaults>
</compile_context>

<pallas_src>
import functools

import jax
import jax.numpy as jnp
from jax import lax
from jax.experimental import pallas as pl
from jax.experimental.pallas import tpu as pltpu


def _round_up(n, m):
    return ((n + m - 1) // m) * m


# ----------------------------- kernels --------------------------------------


def _lambda_kernel_mlp(x_ref, w_ref, b_ref, cw_ref, cb_ref, o_ref, *, n_mlp):
    """num_layers > 1: stacked (Linear -> Tanh) feature extractor + cls head.

    x_ref : (TB, H)    batch tile (f32 or bf16)
    w_ref : (L, H, H)  stacked MLP weights, pre-transposed: y = x @ W + b
    b_ref : (L, H)     stacked MLP biases
    cw_ref: (1, H)     cls weight row (PyTorch nn.Linear(H, 1).weight layout)
    cb_ref: (1,)       cls bias, float32, resident in SMEM
    o_ref : (1, TB)    lane-dense output row (one logit per batch row)
    """
    compute_dtype = w_ref.dtype  # keep MXU operands at weight precision (bf16 stays bf16)
    feats = x_ref[...].astype(compute_dtype)

    def layer(l, f):
        h = jnp.dot(f, w_ref[l], preferred_element_type=jnp.float32)
        h = h + b_ref[pl.ds(l, 1), :].astype(jnp.float32)
        return jnp.tanh(h).astype(compute_dtype)  # tanh on EUP in f32, cast back for MXU

    if n_mlp <= 4:
        # Small stacks: static unroll keeps scheduling simple.
        for l in range(n_mlp):
            feats = layer(l, feats)
    else:
        # Deep stacks: fori_loop bounds live ranges / vreg pressure.
        feats = lax.fori_loop(0, n_mlp, layer, feats)

    # cls head on the MXU, lane-dense (1, TB) result:
    #   (1, H) x (TB, H) contracting H with H.
    logits = lax.dot_general(
        cw_ref[...].astype(compute_dtype), feats,
        dimension_numbers=(((1,), (1,)), ((), ())),
        preferred_element_type=jnp.float32,
    )
    logits = logits + cb_ref[0]
    o_ref[...] = logits.astype(o_ref.dtype)


def _lambda_kernel_identity(x_ref, cw_ref, cb_ref, o_ref):
    """num_layers == 1: Identity features, cls only (mem-bound matvec on the MXU)."""
    feats = x_ref[...]
    cw = cw_ref[...].astype(feats.dtype)
    logits = lax.dot_general(
        cw, feats,
        dimension_numbers=(((1,), (1,)), ((), ())),
        preferred_element_type=jnp.float32,
    )
    logits = logits + cb_ref[0]
    o_ref[...] = logits.astype(o_ref.dtype)


# ----------------------------- wrapper ---------------------------------------

# Errors that indicate pl.Buffered(1) single-buffering is not supported by this
# jax build / pipeline; anything else is a genuine error and must surface.
_FALLBACK_ERRORS = (pltpu.LoweringException, NotImplementedError, ValueError)


def _invariant_spec(shape, single_buffer):
    """BlockSpec for a grid-invariant operand (same block at every grid step)."""
    index_map = lambda i: (0,) * len(shape)
    if single_buffer:
        # Constant index_map -> a second pipeline buffer is pure VMEM waste.
        return pl.BlockSpec(shape, index_map, pipeline_mode=pl.Buffered(1))
    return pl.BlockSpec(shape, index_map)


def _vmem_budget_bytes():
    """Generation-aware scoped-VMEM ceiling (capacity minus headroom)."""
    try:
        cap = int(pltpu.get_tpu_info().vmem_capacity_bytes)  # 128 MiB v5e/v6e, 64 MiB/TC v7x
    except Exception:
        cap = 64 * 1024 * 1024  # conservative fallback
    return max(cap - 16 * 1024 * 1024, 16 * 1024 * 1024)


def _estimate_bytes(tb, H, x_dtype, out_dtype, params, inv):
    """Footprint estimate: x tile (double-buffered) + out row + f32 temps + weights."""
    est = 2 * tb * H * jnp.dtype(x_dtype).itemsize        # x tile, double-buffered
    est += 2 * tb * jnp.dtype(out_dtype).itemsize          # (1, tb) out row, double-buffered
    est += 3 * tb * H * 4                                   # in-kernel f32 temporaries
    if params["mlp_w"] is not None:
        wi = jnp.dtype(params["mlp_w"].dtype).itemsize
        est += inv * (params["mlp_w"].size + params["mlp_b"].size) * wi
    est += inv * params["cls_w"].size * jnp.dtype(params["cls_w"].dtype).itemsize
    est += 2 * 1024 * 1024                                  # compiler slack
    return int(est)


def lambda_layer_forward(x, params, *, tb=1024):
    """LambdaLayer.forward (rnn=False) as a Pallas TPU kernel.

    x      : (B, H) activations
    params : dict with
        "mlp_w": (L, H, H) or None   (pre-transposed: y = x @ W + b)
        "mlp_b": (L, H)    or None
        "cls_w": (1, H)              (PyTorch nn.Linear(H, 1).weight layout)
        "cls_b": (1,) float32
    Returns (B, 1) logits, matching the PyTorch module.
    """
    B, H = x.shape
    # Large batch tiles amortize the ~0.35us per-grid-step overhead; clamp for
    # small batches; no wrapper-side padding (Pallas handles the partial block).
    tb = _round_up(max(8, min(tb, _round_up(B, 8))), 8)

    budget = _vmem_budget_bytes()
    # Weight-residency guard (mainly v7x's 64 MiB/TC): if the f32 weight stack
    # (worst case: double-buffered fallback) cannot co-reside with the tiles,
    # store MLP weights in bf16 (the MXU runs bf16 anyway; halves residency).
    # Note: this slightly changes numerics for very large L*H*H configs.
    if (params["mlp_w"] is not None
            and params["mlp_w"].dtype == jnp.float32
            and _estimate_bytes(tb, H, x.dtype, x.dtype, params, inv=2) > budget):
        params = dict(params,
                      mlp_w=params["mlp_w"].astype(jnp.bfloat16),
                      mlp_b=params["mlp_b"].astype(jnp.bfloat16))
    # If it still does not fit, shrink the batch tile.
    while tb > 8 and _estimate_bytes(tb, H, x.dtype, x.dtype, params, inv=2) > budget:
        tb = max(8, tb // 2)

    nt = pl.cdiv(B, tb)
    grid = (nt,)

    # Lane-dense output: one (1, tb) row per grid step -> (nt, tb), reshaped below.
    out_shape = jax.ShapeDtypeStruct((nt, tb), x.dtype)
    x_spec = pl.BlockSpec((tb, H), lambda i: (i, 0))
    out_spec = pl.BlockSpec((1, tb), lambda i: (i, 0))
    cb_spec = pl.BlockSpec(memory_space=pltpu.MemorySpace.SMEM)  # scalar bias in SMEM

    def build_call(single_buffer):
        inv = 1 if single_buffer else 2
        cw_spec = _invariant_spec((1, H), single_buffer)
        vmem_limit = int(min(max(_estimate_bytes(tb, H, x.dtype, x.dtype, params, inv),
                                 16 * 1024 * 1024), budget))
        compiler_params = pltpu.CompilerParams(
            dimension_semantics=("parallel",),
            vmem_limit_bytes=vmem_limit,
        )
        if params["mlp_w"] is None:
            # num_layers == 1 -> Identity feature extractor.
            call = pl.pallas_call(
                _lambda_kernel_identity,
                out_shape=out_shape,
                grid_spec=pltpu.PrefetchScalarGridSpec(
                    num_scalar_prefetch=0,
                    grid=grid,
                    in_specs=[x_spec, cw_spec, cb_spec],
                    out_specs=out_spec,
                ),
                compiler_params=compiler_params,
            )
            args = (x, params["cls_w"], params["cls_b"])
            return call, args
        L = params["mlp_w"].shape[0]
        w_spec = _invariant_spec((L, H, H), single_buffer)
        b_spec = _invariant_spec((L, H), single_buffer)
        call = pl.pallas_call(
            functools.partial(_lambda_kernel_mlp, n_mlp=L),
            out_shape=out_shape,
            grid_spec=pltpu.PrefetchScalarGridSpec(
                num_scalar_prefetch=0,
                grid=grid,
                in_specs=[x_spec, w_spec, b_spec, cw_spec, cb_spec],
                out_specs=out_spec,
            ),
            compiler_params=compiler_params,
        )
        args = (x, params["mlp_w"], params["mlp_b"], params["cls_w"], params["cls_b"])
        return call, args

    try:
        call, args = build_call(single_buffer=True)
        out = call(*args)
    except _FALLBACK_ERRORS:
        # Only for builds where pl.Buffered(1) is rejected by the TPU pipeline:
        # identical math, default double-buffering (budgeted with inv=2 above).
        call, args = build_call(single_buffer=False)
        out = call(*args)

    # (nt, tb) row-major -> (nt*tb, 1); drop the tail rows of the partial block.
    return out.reshape(nt * tb, 1)[:B]


# ------------------------ deterministic param init ---------------------------


def init_lambda_layer_params(key, num_layers, hidden_dim, dtype=jnp.float32):
    """PyTorch nn.Linear-style init: U(-1/sqrt(fan_in), 1/sqrt(fan_in)).

    MLP weights are stored pre-transposed (y = x @ W + b); cls_w keeps the
    PyTorch (1, hidden) layout; cls_b is float32 (lives in SMEM).
    """
    bound = 1.0 / (hidden_dim ** 0.5)
    keys = jax.random.split(key, 2 * num_layers + 2)
    if num_layers > 1:
        ws, bs = [], []
        for l in range(num_layers):
            w = jax.random.uniform(keys[2 * l], (hidden_dim, hidden_dim),
                                   jnp.float32, -bound, bound).astype(dtype)
            b = jax.random.uniform(keys[2 * l + 1], (hidden_dim,),
                                   jnp.float32, -bound, bound).astype(dtype)
            ws.append(w)
            bs.append(b)
        mlp_w = jnp.stack(ws)  # (L, H, H)
        mlp_b = jnp.stack(bs)  # (L, H)
    else:
        mlp_w = None
        mlp_b = None
    cls_w = jax.random.uniform(keys[-2], (1, hidden_dim),
                               jnp.float32, -bound, bound).astype(dtype)
    cls_b = jax.random.uniform(keys[-1], (1,), jnp.float32, -bound, bound)
    return {"mlp_w": mlp_w, "mlp_b": mlp_b, "cls_w": cls_w, "cls_b": cls_b}


def reference_forward(x, params):
    """Pure-JAX reference mirroring the kernel's dtype handling."""
    if params["mlp_w"] is not None:
        compute_dtype = params["mlp_w"].dtype
        feats = x.astype(compute_dtype)
        for l in range(params["mlp_w"].shape[0]):
            h = jnp.dot(feats, params["mlp_w"][l],
                        preferred_element_type=jnp.float32)
            h = h + params["mlp_b"][l].astype(jnp.float32)
            feats = jnp.tanh(h).astype(compute_dtype)
        cw = params["cls_w"].astype(compute_dtype)
    else:
        feats = x
        cw = params["cls_w"].astype(x.dtype)
    logits = lax.dot_general(cw, feats,
                             dimension_numbers=(((1,), (1,)), ((), ())),
                             preferred_element_type=jnp.float32)  # (1, B)
    logits = logits + params["cls_b"].astype(jnp.float32)
    return logits.T.astype(x.dtype)  # (B, 1)


# ------------------------------- demo ----------------------------------------

if __name__ == "__main__":
    key = jax.random.PRNGKey(0)
    k_x1, k_x2, k_x4, k_p1, k_p2, k_p3, k_p4, k_x5, k_p5 = jax.random.split(key, 9)

    H = 128  # lane-friendly hidden size for the demo

    # Case 1: num_layers=2 (Sequential(Linear, Tanh) x 2 + cls), float32.
    B1 = 8
    x1 = jax.random.normal(k_x1, (B1, H), dtype=jnp.float32)
    p1 = init_lambda_layer_params(k_p1, num_layers=2, hidden_dim=H)
    o1 = jax.block_until_ready(lambda_layer_forward(x1, p1))
    r1 = reference_forward(x1, p1)
    assert o1.shape == (B1, 1)
    assert jnp.allclose(o1, r1, atol=1e-4, rtol=1e-4), "mlp f32 mismatch"

    # Case 2: num_layers=1 (Identity + cls), ragged batch exercises the
    # partial boundary block (no wrapper-side padding).
    B2 = 10
    x2 = jax.random.normal(k_x2, (B2, H), dtype=jnp.float32)
    p2 = init_lambda_layer_params(k_p2, num_layers=1, hidden_dim=H)
    o2 = jax.block_until_ready(lambda_layer_forward(x2, p2))
    r2 = reference_forward(x2, p2)
    assert o2.shape == (B2, 1)
    assert jnp.allclose(o2, r2, atol=1e-4, rtol=1e-4), "identity mismatch"

    # Case 3: bf16 weights/activations keep the MXU at its bf16 rate.
    x3 = x1.astype(jnp.bfloat16)
    p3 = init_lambda_layer_params(k_p3, num_layers=2, hidden_dim=H,
                                  dtype=jnp.bfloat16)
    o3 = jax.block_until_ready(lambda_layer_forward(x3, p3))
    r3 = reference_forward(x3, p3)
    assert o3.shape == (B1, 1)
    assert jnp.allclose(o3.astype(jnp.float32), r3.astype(jnp.float32),
                        atol=2e-2, rtol=2e-2), "mlp bf16 mismatch"

    # Case 4: deep stack (L=6) exercises the fori_loop path with dynamic w_ref[l].
    B4 = 8
    x4 = jax.random.normal(k_x4, (B4, H), dtype=jnp.float32)
    p4 = init_lambda_layer_params(k_p4, num_layers=6, hidden_dim=H)
    o4 = jax.block_until_ready(lambda_layer_forward(x4, p4))
    r4 = reference_forward(x4, p4)
    assert o4.shape == (B4, 1)
    assert jnp.allclose(o4, r4, atol=5e-4, rtol=5e-4), "deep mlp mismatch"

    # Case 5: multi-tile grid with a ragged tail (B=40, tb=16 -> 3 grid steps,
    # last block partial) exercises the lane-dense (1, tb) output path.
    B5 = 40
    x5 = jax.random.normal(k_x5, (B5, H), dtype=jnp.float32)
    p5 = init_lambda_layer_params(k_p5, num_layers=2, hidden_dim=H)
    o5 = jax.block_until_ready(lambda_layer_forward(x5, p5, tb=16))
    r5 = reference_forward(x5, p5)
    assert o5.shape == (B5, 1)
    assert jnp.allclose(o5, r5, atol=1e-4, rtol=1e-4), "multi-tile mismatch"

    print("KERNEL_OK")
</pallas_src>

<mosaic_0001>
module attributes {stable_mosaic.version = 11 : i64} {
  func.func @_lambda_kernel_mlp(%arg0: i32, %arg1: memref<8x128xf32, #tpu.memory_space<vmem>>, %arg2: memref<2x128x128xf32, #tpu.memory_space<vmem>>, %arg3: memref<2x128xf32, #tpu.memory_space<vmem>>, %arg4: memref<1x128xf32, #tpu.memory_space<vmem>>, %arg5: memref<1xf32, #tpu.memory_space<smem>>, %arg6: memref<1x8xf32, #tpu.memory_space<vmem>>) attributes {dimension_semantics = [#tpu.dimension_semantics<parallel>], iteration_bounds = array<i64: 1>, scalar_prefetch = 0 : i64, scratch_operands = 0 : i64, tpu.core_type = #tpu.core_type<tc>, window_params = [{transform_indices = @transform_0, window_bounds = array<i64: 8, 128>}, {pipeline_mode = #tpu.pipeline_mode<synchronous>, transform_indices = @transform_1, window_bounds = array<i64: 2, 128, 128>}, {pipeline_mode = #tpu.pipeline_mode<synchronous>, transform_indices = @transform_2, window_bounds = array<i64: 2, 128>}, {pipeline_mode = #tpu.pipeline_mode<synchronous>, transform_indices = @transform_3, window_bounds = array<i64: 1, 128>}, {transform_indices = @transform_4, window_bounds = array<i64: 1>}, {transform_indices = @transform_5, window_bounds = array<i64: 1, 8>}]} {
    %c0 = arith.constant 0 : index
    %c0_0 = arith.constant 0 : index
    %0 = vector.load %arg1[%c0, %c0_0] : memref<8x128xf32, #tpu.memory_space<vmem>>, vector<8x128xf32>
    %c0_1 = arith.constant 0 : index
    %c0_2 = arith.constant 0 : index
    %c0_3 = arith.constant 0 : index
    %1 = vector.load %arg2[%c0_1, %c0_2, %c0_3] : memref<2x128x128xf32, #tpu.memory_space<vmem>>, vector<1x128x128xf32>
    %2 = vector.shape_cast %1 : vector<1x128x128xf32> to vector<128x128xf32>
    %cst = arith.constant dense<0.000000e+00> : vector<8x128xf32>
    %3 = tpu.matmul %0, %2, %cst {dimension_numbers = #tpu.dot_dimension_numbers<[1], [0], [0], [1], [0, 0, 1, 1], [], []>} : vector<8x128xf32>, vector<128x128xf32>, vector<8x128xf32> -> vector<8x128xf32>
    %c0_4 = arith.constant 0 : index
    %c0_5 = arith.constant 0 : index
    %4 = vector.load %arg3[%c0_4, %c0_5] : memref<2x128xf32, #tpu.memory_space<vmem>>, vector<1x128xf32>
    %5 = vector.broadcast %4 : vector<1x128xf32> to vector<8x128xf32>
    %6 = arith.addf %3, %5 : vector<8x128xf32>
    %7 = math.tanh %6 : vector<8x128xf32>
    %c1 = arith.constant 1 : index
    %c0_6 = arith.constant 0 : index
    %c0_7 = arith.constant 0 : index
    %8 = vector.load %arg2[%c1, %c0_6, %c0_7] : memref<2x128x128xf32, #tpu.memory_space<vmem>>, vector<1x128x128xf32>
    %9 = vector.shape_cast %8 : vector<1x128x128xf32> to vector<128x128xf32>
    %cst_8 = arith.constant dense<0.000000e+00> : vector<8x128xf32>
    %10 = tpu.matmul %7, %9, %cst_8 {dimension_numbers = #tpu.dot_dimension_numbers<[1], [0], [0], [1], [0, 0, 1, 1], [], []>} : vector<8x128xf32>, vector<128x128xf32>, vector<8x128xf32> -> vector<8x128xf32>
    %c1_9 = arith.constant 1 : index
    %c0_10 = arith.constant 0 : index
    %11 = vector.load %arg3[%c1_9, %c0_10] : memref<2x128xf32, #tpu.memory_space<vmem>>, vector<1x128xf32>
    %12 = vector.broadcast %11 : vector<1x128xf32> to vector<8x128xf32>
    %13 = arith.addf %10, %12 : vector<8x128xf32>
    %14 = math.tanh %13 : vector<8x128xf32>
    %c0_11 = arith.constant 0 : index
    %c0_12 = arith.constant 0 : index
    %15 = vector.load %arg4[%c0_11, %c0_12] : memref<1x128xf32, #tpu.memory_space<vmem>>, vector<1x128xf32>
    %cst_13 = arith.constant dense<0.000000e+00> : vector<1x8xf32>
    %16 = tpu.matmul %15, %14, %cst_13 {dimension_numbers = #tpu.dot_dimension_numbers<[1], [1], [0], [0], [0, 0, 1, 0], [], []>} : vector<1x128xf32>, vector<8x128xf32>, vector<1x8xf32> -> vector<1x8xf32>
    %c0_14 = arith.constant 0 : index
    %17 = memref.load %arg5[%c0_14] : memref<1xf32, #tpu.memory_space<smem>>
    %18 = vector.broadcast %17 : f32 to vector<1x8xf32>
    %19 = arith.addf %16, %18 : vector<1x8xf32>
    %c0_15 = arith.constant 0 : index
    %c0_16 = arith.constant 0 : index
    %20 = vector.load %arg6[%c0_15, %c0_16] : memref<1x8xf32, #tpu.memory_space<vmem>>, vector<1x8xf32>
    tpu.vector_store %arg6[%c0_15, %c0_16], %19 {strides = array<i32>} : memref<1x8xf32, #tpu.memory_space<vmem>>, vector<1x8xf32>,
    return
  }
  func.func @transform_0(%arg0: i32) -> (i32, i32) {
    %c0_i32 = arith.constant 0 : i32
    %c0_i32_0 = arith.constant 0 : i32
    return %arg0, %c0_i32 : i32, i32
  }
  func.func @transform_1(%arg0: i32) -> (i32, i32, i32) {
    %c0_i32 = arith.constant 0 : i32
    %c0_i32_0 = arith.constant 0 : i32
    %c0_i32_1 = arith.constant 0 : i32
    %c0_i32_2 = arith.constant 0 : i32
    return %c0_i32, %c0_i32_0, %c0_i32_1 : i32, i32, i32
  }
  func.func @transform_2(%arg0: i32) -> (i32, i32) {
    %c0_i32 = arith.constant 0 : i32
    %c0_i32_0 = arith.constant 0 : i32
    %c0_i32_1 = arith.constant 0 : i32
    return %c0_i32, %c0_i32_0 : i32, i32
  }
  func.func @transform_3(%arg0: i32) -> (i32, i32) {
    %c0_i32 = arith.constant 0 : i32
    %c0_i32_0 = arith.constant 0 : i32
    %c0_i32_1 = arith.constant 0 : i32
    return %c0_i32, %c0_i32_0 : i32, i32
  }
  func.func @transform_4(%arg0: i32) -> i32 {
    %c0_i32 = arith.constant 0 : i32
    %c0_i32_0 = arith.constant 0 : i32
    return %c0_i32 : i32
  }
  func.func @transform_5(%arg0: i32) -> (i32, i32) {
    %c0_i32 = arith.constant 0 : i32
    %c0_i32_0 = arith.constant 0 : i32
    return %arg0, %c0_i32 : i32, i32
  }
}

</mosaic_0001>

<llo_original>
// kernel: tpu_custom_call.1
$region0: #{tpu_custom_call.1}
  #allocation0 [shape = 'u32[]', space=smem, size = 0x4, offset = 0x4, fixed_abs, tag = 'smem constant byte address 0x4 - core index']
  #allocation1 [shape = 'u32[144,128]{1,0:T(1,128)}', space=vmem, size = 0x12000, scoped, tag = 'internal scratch']
  #allocation2 [shape = 'f32[1]{0:T(128)S(6)}', space=smem, size = 0x200, scoped, tag = 'scoped memory for tpu_custom_call.1']
  %s0 = inlined_call_operand.hbm [shape: f32[8,128], index: 0, kind: input, shape index: {}]
  %s1 = inlined_call_operand.hbm [shape: f32[2,128,128], index: 1, kind: input, shape index: {}]
  %s2 = inlined_call_operand.vmem [shape: f32[2,128], index: 2, kind: input, shape index: {}]
  %s3 = inlined_call_operand.vmem [shape: f32[1,128], index: 3, kind: input, shape index: {}]
  %s4 = inlined_call_operand.<no memory space> [shape: f32[1], index: 4, kind: input, shape index: {}]
  %s5 = inlined_call_operand.hbm [shape: f32[1,8], index: 5, kind: output, shape index: {}]
  %s6 = sld [smem:[#allocation0]]
  $region38: #{tpu_custom_call.1} parent=0
    _
  %s8 = ssub.s32 1, %s6
  %s9 = scalar_select 0, %s8, %s6
  %10 = sst [smem:[#allocation2]] %s4
  $region1: #{tpu_custom_call.1} parent=0
    #allocation3 [shape = 'u8[4096]{0}', space=vmem, size = 0x1000, scoped, tag = 'input window, operand 0, single buffered']
    #allocation4 [shape = 's32[1]{0}', space=sflag, size = 0x4, scoped, tag = 'scoped memory for tpu_custom_call.1']
    #allocation5 [shape = 's32[1]{0}', space=sflag, size = 0x4, scoped, tag = 'scoped memory for tpu_custom_call.1']
    #allocation6 [shape = 'u8[131072]{0}', space=vmem, size = 0x20000, scoped, tag = 'input window, operand 1, single buffered']
    #allocation7 [shape = 's32[1]{0}', space=sflag, size = 0x4, scoped, tag = 'scoped memory for tpu_custom_call.1']
    #allocation8 [shape = 'u8[512]{0}', space=vmem, size = 0x400, scoped, tag = 'output window, operand 0, single buffered']
    %11 = vsyncpa [#allocation4], 0
    %12 = vsyncpa [#allocation7], 0
    %13 = vsyncpa [#allocation5], 0
    // Predicated region
    $region2: #{tpu_custom_call.1} parent=1 // pred_check
      _
    $region3: #{tpu_custom_call.1} parent=1 // pred_check_branch
      %15 = sbr.rel (0) target = $region5
    $region4: #{tpu_custom_call.1} parent=1 // pred_region
      %s17 = ssub.s32 128, 128
      %18 = vsyncadd [#allocation4], %s17
      %s20 = sshll.u32 [#allocation3], 4
      %s21 = int_to_ptr.vmem [resolvable:$true] %s20
      %23 = dma.hbm_to_vmem [thread:$0]  %s0, 128, %s21, [#allocation4]
    $region5: #{tpu_custom_call.1} parent=1 // pred_fallthru
      _
    // Predicated region
    $region6: #{tpu_custom_call.1} parent=1 // pred_check
      _
    $region7: #{tpu_custom_call.1} parent=1 // pred_check_branch
      %25 = sbr.rel (0) target = $region9
    $region8: #{tpu_custom_call.1} parent=1 // pred_region
      %s27 = ssub.s32 4096, 4096
      %28 = vsyncadd [#allocation7], %s27
      %s29 = sshll.u32 [#allocation6], 4
      %s30 = int_to_ptr.vmem [resolvable:$true] %s29
      %35 = dma.hbm_to_vmem [thread:$0]  %s1, 4096, %s30, [#allocation7], 128, 128, 8
    $region9: #{tpu_custom_call.1} parent=1 // pred_fallthru
      _
    // Predicated region
    $region10: #{tpu_custom_call.1} parent=1 // pred_check
      _
    $region11: #{tpu_custom_call.1} parent=1 // pred_check_branch
      %37 = sbr.rel (0) target = $region13
    $region12: #{tpu_custom_call.1} parent=1 // pred_region
      _
    $region13: #{tpu_custom_call.1} parent=1 // pred_fallthru
      _
    // Predicated region
    $region14: #{tpu_custom_call.1} parent=1 // pred_check
      _
    $region15: #{tpu_custom_call.1} parent=1 // pred_check_branch
      %39 = sbr.rel (0) target = $region17
    $region16: #{tpu_custom_call.1} parent=1 // pred_region
      _
    $region17: #{tpu_custom_call.1} parent=1 // pred_fallthru
      _
    // Predicated region
    $region18: #{tpu_custom_call.1} parent=1 // pred_check
      _
    $region19: #{tpu_custom_call.1} parent=1 // pred_check_branch
      %41 = sbr.rel (0) target = $region21
    $region20: #{tpu_custom_call.1} parent=1 // pred_region
      _
    $region21: #{tpu_custom_call.1} parent=1 // pred_fallthru
      _
    // Predicated region
    $region22: #{tpu_custom_call.1} parent=1 // pred_check
      _
    $region23: #{tpu_custom_call.1} parent=1 // pred_check_branch
      %43 = sbr.rel (0) target = $region25
    $region24: #{tpu_custom_call.1} parent=1 // pred_region
      %44 = dma.done [#allocation4], 128
    $region25: #{tpu_custom_call.1} parent=1 // pred_fallthru
      _
    // Predicated region
    $region26: #{tpu_custom_call.1} parent=1 // pred_check
      _
    $region27: #{tpu_custom_call.1} parent=1 // pred_check_branch
      %46 = sbr.rel (0) target = $region29
    $region28: #{tpu_custom_call.1} parent=1 // pred_region
      %47 = dma.done [#allocation7], 4096
    $region29: #{tpu_custom_call.1} parent=1 // pred_fallthru
      _
    %v48 = vld [vmem:[#allocation3] sm:$0xff]
    %v49 = vld [vmem:[#allocation6] sm:$0xff]
    %v50 = vld [vmem:[#allocation6 + $0x8] sm:$0xff]
    %v51 = vld [vmem:[#allocation6 + $0x10] sm:$0xff]
    %v52 = vld [vmem:[#allocation6 + $0x18] sm:$0xff]
    %v53 = vld [vmem:[#allocation6 + $0x20] sm:$0xff]
    %v54 = vld [vmem:[#allocation6 + $0x28] sm:$0xff]
    %v55 = vld [vmem:[#allocation6 + $0x30] sm:$0xff]
    %v56 = vld [vmem:[#allocation6 + $0x38] sm:$0xff]
    %v57 = vld [vmem:[#allocation6 + $0x40] sm:$0xff]
    %v58 = vld [vmem:[#allocation6 + $0x48] sm:$0xff]
    %v59 = vld [vmem:[#allocation6 + $0x50] sm:$0xff]
    %v60 = vld [vmem:[#allocation6 + $0x58] sm:$0xff]
    %v61 = vld [vmem:[#allocation6 + $0x60] sm:$0xff]
    %v62 = vld [vmem:[#allocation6 + $0x68] sm:$0xff]
    %v63 = vld [vmem:[#allocation6 + $0x70] sm:$0xff]
    %v64 = vld [vmem:[#allocation6 + $0x78] sm:$0xff]
    %v65 = vld [vmem:[%s2] sm:$0x1]
    %v66 = vlaneseq
    %v67 = vshrl.u32 %v66, 7
    %v68 = vsub.s32 0, %v67
    %v69 = vrot.slane %v65, %v68
    %70 = vmatprep.subr.mxu0 0.0
    %71 = vmatpush1.msra.mxu0 %v49
    %72 = vmatprep.subr.mxu0 0.0
    %73 = vmatpush1.msra.mxu0 %v50
    %74 = vmatprep.subr.mxu0 0.0
    %75 = vmatpush1.msra.mxu0 %v51
    %76 = vmatprep.subr.mxu0 0.0
    %77 = vmatpush1.msra.mxu0 %v52
    %78 = vmatprep.subr.mxu0 0.0
    %79 = vmatpush1.msra.mxu0 %v53
    %80 = vmatprep.subr.mxu0 0.0
    %81 = vmatpush1.msra.mxu0 %v54
    %82 = vmatprep.subr.mxu0 0.0
    %83 = vmatpush1.msra.mxu0 %v55
    %84 = vmatprep.subr.mxu0 0.0
    %85 = vmatpush1.msra.mxu0 %v56
    %86 = vmatprep.subr.mxu0 0.0
    %87 = vmatpush1.msra.mxu0 %v57
    %88 = vmatprep.subr.mxu0 0.0
    %89 = vmatpush1.msra.mxu0 %v58
    %90 = vmatprep.subr.mxu0 0.0
    %91 = vmatpush1.msra.mxu0 %v59
    %92 = vmatprep.subr.mxu0 0.0
    %93 = vmatpush1.msra.mxu0 %v60
    %94 = vmatprep.subr.mxu0 0.0
    %95 = vmatpush1.msra.mxu0 %v61
    %96 = vmatprep.subr.mxu0 0.0
    %97 = vmatpush1.msra.mxu0 %v62
    %98 = vmatprep.subr.mxu0 0.0
    %99 = vmatpush1.msra.mxu0 %v63
    %100 = vmatprep.subr.mxu0 0.0
    %101 = vmatpush1.msra.mxu0 %v64
    %102 = vmatprep.subr.mxu0 0.0
    %103 = vmatpush1.msra.mxu0 0.0
    %104 = vmatprep.subr.mxu0 0.0
    %105 = vmatpush1.msra.mxu0 0.0
    %106 = vmatprep.subr.mxu0 0.0
    %107 = vmatpush1.msra.mxu0 0.0
    %108 = vmatprep.subr.mxu0 0.0
    %109 = vmatpush1.msra.mxu0 0.0
    %110 = vmatprep.subr.mxu0 0.0
    %111 = vmatpush1.msra.mxu0 0.0
    %112 = vmatprep.subr.mxu0 0.0
    %113 = vmatpush1.msra.mxu0 0.0
    %114 = vmatprep.subr.mxu0 0.0
    %115 = vmatpush1.msra.mxu0 0.0
    %116 = vmatprep.subr.mxu0 0.0
    %117 = vmatpush1.msra.mxu0 0.0
    %118 = vmatprep.subr.mxu0 0.0
    %119 = vmatpush1.msra.mxu0 0.0
    %120 = vmatprep.subr.mxu0 0.0
    %121 = vmatpush1.msra.mxu0 0.0
    %122 = vmatprep.subr.mxu0 0.0
    %123 = vmatpush1.msra.mxu0 0.0
    %124 = vmatprep.subr.mxu0 0.0
    %125 = vmatpush1.msra.mxu0 0.0
    %126 = vmatprep.subr.mxu0 0.0
    %127 = vmatpush1.msra.mxu0 0.0
    %128 = vmatprep.subr.mxu0 0.0
    %129 = vmatpush1.msra.mxu0 0.0
    %130 = vmatprep.subr.mxu0 0.0
    %131 = vmatpush1.msra.mxu0 0.0
    %132 = vmatprep.subr.mxu0 0.0
    %133 = vmatpush1.msra.mxu0 0.0
    %134 = vmatprep.mubr.f32.mxu0 0.0
    %135 = vmatmul.mubr.f32.gmra.mrb[0].mxu0 %v48
    %v136 = vpop.f32.mrb[0].mxu0
    %v137 = vadd.f32 %v69, %v136
    %v138 = vpop.f32.mrb[0].mxu0
    %139 = vdwg.mxu0
    %v140 = vtanh.pop %v137
    %s141 = scalar_lea.vmem [#allocation6], 128
    %v142 = vld [vmem:[%s141] sm:$0xff]
    %v143 = vld [vmem:[%s141 + $0x8] sm:$0xff]
    %v144 = vld [vmem:[%s141 + $0x10] sm:$0xff]
    %v145 = vld [vmem:[%s141 + $0x18] sm:$0xff]
    %v146 = vld [vmem:[%s141 + $0x20] sm:$0xff]
    %v147 = vld [vmem:[%s141 + $0x28] sm:$0xff]
    %v148 = vld [vmem:[%s141 + $0x30] sm:$0xff]
    %v149 = vld [vmem:[%s141 + $0x38] sm:$0xff]
    %v150 = vld [vmem:[%s141 + $0x40] sm:$0xff]
    %v151 = vld [vmem:[%s141 + $0x48] sm:$0xff]
    %v152 = vld [vmem:[%s141 + $0x50] sm:$0xff]
    %v153 = vld [vmem:[%s141 + $0x58] sm:$0xff]
    %v154 = vld [vmem:[%s141 + $0x60] sm:$0xff]
    %v155 = vld [vmem:[%s141 + $0x68] sm:$0xff]
    %v156 = vld [vmem:[%s141 + $0x70] sm:$0xff]
    %v157 = vld [vmem:[%s141 + $0x78] sm:$0xff]
    %v158 = vld [vmem:[%s2 + $0x1] sm:$0x1]
    %v159 = vlaneseq
    %v160 = vshrl.u32 %v159, 7
    %v161 = vsub.s32 0, %v160
    %v162 = vrot.slane %v158, %v161
    %163 = vmatprep.subr.mxu0 0.0
    %164 = vmatpush1.msra.mxu0 %v142
    %165 = vmatprep.subr.mxu0 0.0
    %166 = vmatpush1.msra.mxu0 %v143
    %167 = vmatprep.subr.mxu0 0.0
    %168 = vmatpush1.msra.mxu0 %v144
    %169 = vmatprep.subr.mxu0 0.0
    %170 = vmatpush1.msra.mxu0 %v145
    %171 = vmatprep.subr.mxu0 0.0
    %172 = vmatpush1.msra.mxu0 %v146
    %173 = vmatprep.subr.mxu0 0.0
    %174 = vmatpush1.msra.mxu0 %v147
    %175 = vmatprep.subr.mxu0 0.0
    %176 = vmatpush1.msra.mxu0 %v148
    %177 = vmatprep.subr.mxu0 0.0
    %178 = vmatpush1.msra.mxu0 %v149
    %179 = vmatprep.subr.mxu0 0.0
    %180 = vmatpush1.msra.mxu0 %v150
    %181 = vmatprep.subr.mxu0 0.0
    %182 = vmatpush1.msra.mxu0 %v151
    %183 = vmatprep.subr.mxu0 0.0
    %184 = vmatpush1.msra.mxu0 %v152
    %185 = vmatprep.subr.mxu0 0.0
    %186 = vmatpush1.msra.mxu0 %v153
    %187 = vmatprep.subr.mxu0 0.0
    %188 = vmatpush1.msra.mxu0 %v154
    %189 = vmatprep.subr.mxu0 0.0
    %190 = vmatpush1.msra.mxu0 %v155
    %191 = vmatprep.subr.mxu0 0.0
    %192 = vmatpush1.msra.mxu0 %v156
    %193 = vmatprep.subr.mxu0 0.0
    %194 = vmatpush1.msra.mxu0 %v157
    %195 = vmatprep.subr.mxu0 0.0
    %196 = vmatpush1.msra.mxu0 0.0
    %197 = vmatprep.subr.mxu0 0.0
    %198 = vmatpush1.msra.mxu0 0.0
    %199 = vmatprep.subr.mxu0 0.0
    %200 = vmatpush1.msra.mxu0 0.0
    %201 = vmatprep.subr.mxu0 0.0
    %202 = vmatpush1.msra.mxu0 0.0
    %203 = vmatprep.subr.mxu0 0.0
    %204 = vmatpush1.msra.mxu0 0.0
    %205 = vmatprep.subr.mxu0 0.0
    %206 = vmatpush1.msra.mxu0 0.0
    %207 = vmatprep.subr.mxu0 0.0
    %208 = vmatpush1.msra.mxu0 0.0
    %209 = vmatprep.subr.mxu0 0.0
    %210 = vmatpush1.msra.mxu0 0.0
    %211 = vmatprep.subr.mxu0 0.0
    %212 = vmatpush1.msra.mxu0 0.0
    %213 = vmatprep.subr.mxu0 0.0
    %214 = vmatpush1.msra.mxu0 0.0
    %215 = vmatprep.subr.mxu0 0.0
    %216 = vmatpush1.msra.mxu0 0.0
    %217 = vmatprep.subr.mxu0 0.0
    %218 = vmatpush1.msra.mxu0 0.0
    %219 = vmatprep.subr.mxu0 0.0
    %220 = vmatpush1.msra.mxu0 0.0
    %221 = vmatprep.subr.mxu0 0.0
    %222 = vmatpush1.msra.mxu0 0.0
    %223 = vmatprep.subr.mxu0 0.0
    %224 = vmatpush1.msra.mxu0 0.0
    %225 = vmatprep.subr.mxu0 0.0
    %226 = vmatpush1.msra.mxu0 0.0
    %227 = vmatprep.mubr.f32.mxu0 0.0
    %228 = vmatmul.mubr.f32.gmra.mrb[0].mxu0 %v140
    %v229 = vpop.f32.mrb[0].mxu0
    %v230 = vadd.f32 %v162, %v229
    %v231 = vpop.f32.mrb[0].mxu0
    %232 = vdwg.mxu0
    %v233 = vtanh.pop %v230
    %v234 = vld [vmem:[%s3] sm:$0x1]
    %s235 = sld [smem:[#allocation2]]
    %v236 = vstv %s235
    %237 = vmatprep.subr.mxu0 0.0
    %238 = vmatpush1.xpose.msra.mxu0 %v233
    %239 = vmatprep.subr.mxu0 0.0
    %240 = vmatpush1.xpose.msra.mxu0 0.0
    %241 = vmatprep.subr.mxu0 0.0
    %242 = vmatpush1.xpose.msra.mxu0 0.0
    %243 = vmatprep.subr.mxu0 0.0
    %244 = vmatpush1.xpose.msra.mxu0 0.0
    %245 = vmatprep.subr.mxu0 0.0
    %246 = vmatpush1.xpose.msra.mxu0 0.0
    %247 = vmatprep.subr.mxu0 0.0
    %248 = vmatpush1.xpose.msra.mxu0 0.0
    %249 = vmatprep.subr.mxu0 0.0
    %250 = vmatpush1.xpose.msra.mxu0 0.0
    %251 = vmatprep.subr.mxu0 0.0
    %252 = vmatpush1.xpose.msra.mxu0 0.0
    %253 = vmatprep.subr.mxu0 0.0
    %254 = vmatpush1.xpose.msra.mxu0 0.0
    %255 = vmatprep.subr.mxu0 0.0
    %256 = vmatpush1.xpose.msra.mxu0 0.0
    %257 = vmatprep.subr.mxu0 0.0
    %258 = vmatpush1.xpose.msra.mxu0 0.0
    %259 = vmatprep.subr.mxu0 0.0
    %260 = vmatpush1.xpose.msra.mxu0 0.0
    %261 = vmatprep.subr.mxu0 0.0
    %262 = vmatpush1.xpose.msra.mxu0 0.0
    %263 = vmatprep.subr.mxu0 0.0
    %264 = vmatpush1.xpose.msra.mxu0 0.0
    %265 = vmatprep.subr.mxu0 0.0
    %266 = vmatpush1.xpose.msra.mxu0 0.0
    %267 = vmatprep.subr.mxu0 0.0
    %268 = vmatpush1.xpose.msra.mxu0 0.0
    %269 = vmatprep.subr.mxu0 0.0
    %270 = vmatpush1.xpose.msra.mxu0 0.0
    %271 = vmatprep.subr.mxu0 0.0
    %272 = vmatpush1.xpose.msra.mxu0 0.0
    %273 = vmatprep.subr.mxu0 0.0
    %274 = vmatpush1.xpose.msra.mxu0 0.0
    %275 = vmatprep.subr.mxu0 0.0
    %276 = vmatpush1.xpose.msra.mxu0 0.0
    %277 = vmatprep.subr.mxu0 0.0
    %278 = vmatpush1.xpose.msra.mxu0 0.0
    %279 = vmatprep.subr.mxu0 0.0
    %280 = vmatpush1.xpose.msra.mxu0 0.0
    %281 = vmatprep.subr.mxu0 0.0
    %282 = vmatpush1.xpose.msra.mxu0 0.0
    %283 = vmatprep.subr.mxu0 0.0
    %284 = vmatpush1.xpose.msra.mxu0 0.0
    %285 = vmatprep.subr.mxu0 0.0
    %286 = vmatpush1.xpose.msra.mxu0 0.0
    %287 = vmatprep.subr.mxu0 0.0
    %288 = vmatpush1.xpose.msra.mxu0 0.0
    %289 = vmatprep.subr.mxu0 0.0
    %290 = vmatpush1.xpose.msra.mxu0 0.0
    %291 = vmatprep.subr.mxu0 0.0
    %292 = vmatpush1.xpose.msra.mxu0 0.0
    %293 = vmatprep.subr.mxu0 0.0
    %294 = vmatpush1.xpose.msra.mxu0 0.0
    %295 = vmatprep.subr.mxu0 0.0
    %296 = vmatpush1.xpose.msra.mxu0 0.0
    %297 = vmatprep.subr.mxu0 0.0
    %298 = vmatpush1.xpose.msra.mxu0 0.0
    %299 = vmatprep.subr.mxu0 0.0
    %300 = vmatpush1.xpose.msra.mxu0 0.0
    %301 = vmatprep.mubr.f32.mxu0 0.0
    %302 = vmatmul.mubr.f32.gmra.mrb[0].mxu0 %v234
    %v303 = vpop.f32.mrb[0].mxu0
    %v304 = vadd.f32 %v236, %v303
    %v305 = vpop.f32.mrb[0].mxu0
    %306 = vdwg.mxu0
    %vm307 = vcmask 57344
    %308 = vst.msk [vmem:[#allocation8] sm:$0x1] %vm307, %v304
    // Predicated region
    $region30: #{tpu_custom_call.1} parent=1 // pred_check
      _
    $region31: #{tpu_custom_call.1} parent=1 // pred_check_branch
      %310 = sbr.rel (0) target = $region33
    $region32: #{tpu_custom_call.1} parent=1 // pred_region
      %s312 = ssub.s32 16, 16
      %313 = vsyncadd [#allocation5], %s312
      %s315 = sshll.u32 [#allocation8], 4
      %s316 = int_to_ptr.vmem [resolvable:$true] %s315
      %318 = dma.vmem_to_hbm [thread:$0]  %s316, 16, %s5, [#allocation5]
    $region33: #{tpu_custom_call.1} parent=1 // pred_fallthru
      _
    // Predicated region
    $region34: #{tpu_custom_call.1} parent=1 // pred_check
      _
    $region35: #{tpu_custom_call.1} parent=1 // pred_check_branch
      %320 = sbr.rel (0) target = $region37
    $region36: #{tpu_custom_call.1} parent=1 // pred_region
      %321 = dma.done [#allocation5], 16
    $region37: #{tpu_custom_call.1} parent=1 // pred_fallthru
      _
    %322 = vsyncpa [#allocation4], 1
    %323 = vsyncpa [#allocation7], 1
    %324 = vsyncpa [#allocation5], 1

</llo_original>
